<compile_context>
chip_gen: v5e
topology: v5e:2x2
jax: 0.10.0
libtpu: 0.0.40
codegen_flags: <defaults>
</compile_context>

<pallas_src>
import jax
import jax.numpy as jnp
from jax.experimental import pallas as pl
from jax.experimental.pallas import tpu as pltpu


def _round_up(a, m):
    return ((a + m - 1) // m) * m


def _netc_kernel(x_ref, wt_ref, b_ref, o_ref):
    # x_ref: (TB, K)  wt_ref: (K, C)  b_ref: (1, C)  o_ref: (TB, C)
    logits = jnp.dot(x_ref[...], wt_ref[...],
                     preferred_element_type=jnp.float32) + b_ref[...]
    # Softmax along the class (lane) axis, f32 epilogue, exact normalization.
    m = jnp.max(logits, axis=-1, keepdims=True)
    e = jnp.exp(logits - m)
    denom = jnp.sum(e, axis=-1, keepdims=True)
    o_ref[...] = (e / denom).astype(o_ref.dtype)


def netc_forward(x, v, g, bias, *, block_b=2048):
    """Forward of NetC: softmax(x @ weight_norm(v, g).T + bias, axis=1).

    x: (B, 256); v: (num_class, 256); g: (num_class,) or (num_class, 1);
    bias: (num_class,) or (1, num_class).  Returns (B, num_class) float32.
    """
    B, K = x.shape
    C = v.shape[0]
    operand_dtype = x.dtype  # pass bf16 x from the producer for less read traffic

    # ---- one-time, x-independent parameter prep (hoisted out of the kernel) ----
    # weight_norm (dim=0 for Linear): W[i, :] = g[i] * v[i, :] / ||v[i, :]||_2
    v32 = v.astype(jnp.float32)
    g32 = g.astype(jnp.float32).reshape(C, 1)
    inv_norm = jax.lax.rsqrt(jnp.sum(v32 * v32, axis=1, keepdims=True))
    w_t = (v32 * (g32 * inv_norm)).T.astype(operand_dtype)   # (K, C), pre-transposed
    b_row = bias.reshape(1, C).astype(jnp.float32)            # keep bias f32

    # ---- batch tiling (no padding; ragged final block is masked on writeback) ----
    if B < 16:
        tb = B                                   # tiny batch: one full-dim block
    elif B <= 2 * block_b:
        tb = _round_up(pl.cdiv(B, 2), 8)         # >=2 blocks -> both v7x TCs busy
    else:
        tb = block_b
    n_blocks = pl.cdiv(B, tb)

    out = pl.pallas_call(
        _netc_kernel,
        out_shape=jax.ShapeDtypeStruct((B, C), jnp.float32),
        grid=(n_blocks,),
        in_specs=[
            pl.BlockSpec((tb, K), lambda i: (i, 0)),   # x: streamed over batch
            pl.BlockSpec((K, C), lambda i: (0, 0)),    # W^T: VMEM-resident
            pl.BlockSpec((1, C), lambda i: (0, 0)),    # bias: VMEM-resident, f32
        ],
        out_specs=pl.BlockSpec((tb, C), lambda i: (i, 0)),  # direct (B, C) output
        compiler_params=pltpu.CompilerParams(
            dimension_semantics=("parallel",)),
    )(x, w_t, b_row)

    return out


if __name__ == "__main__":
    B = 2           # small demo batch; grid/megacore path kicks in for B >= 16
    IN = 256        # Linear in_features (fixed by the module)
    NUM_CLASS = 10  # num_class

    key = jax.random.PRNGKey(0)
    kx, kv, kb = jax.random.split(key, 3)

    # Deterministic synthetic parameters (mimicking nn.Linear / weight_norm init):
    # v ~ U(-1/sqrt(IN), 1/sqrt(IN)); g initialized to ||v||_2 per row; bias ~ U(-bound, bound).
    bound = 1.0 / jnp.sqrt(jnp.float32(IN))
    v = jax.random.uniform(kv, (NUM_CLASS, IN), jnp.float32, -bound, bound)
    g = jnp.linalg.norm(v, axis=1, keepdims=True)             # (C, 1)
    bias = jax.random.uniform(kb, (1, NUM_CLASS), jnp.float32, -bound, bound)

    x = jax.random.normal(kx, (B, IN), jnp.float32)

    fwd = jax.jit(netc_forward)
    out = jax.block_until_ready(fwd(x, v, g, bias))

    # Reference check in plain JAX (same math as the PyTorch forward).
    w_ref = v * (g / jnp.linalg.norm(v, axis=1, keepdims=True))
    logits_ref = jnp.dot(x, w_ref.T, precision=jax.lax.Precision.HIGHEST) + bias
    ref = jax.nn.softmax(logits_ref, axis=1)

    assert out.shape == (B, NUM_CLASS)
    # Exact division in the epilogue -> tightened back vs. the approx-reciprocal version.
    assert jnp.allclose(out, ref, atol=1e-4, rtol=1e-4)
    assert jnp.allclose(jnp.sum(out, axis=1), 1.0, atol=1e-5)

    print("KERNEL_OK")
</pallas_src>

<mosaic_0001>
module attributes {stable_mosaic.version = 11 : i64} {
  func.func @_netc_kernel(%arg0: i32, %arg1: memref<2x256xf32, #tpu.memory_space<vmem>>, %arg2: memref<256x10xf32, #tpu.memory_space<vmem>>, %arg3: memref<1x10xf32, #tpu.memory_space<vmem>>, %arg4: memref<2x10xf32, #tpu.memory_space<vmem>>) attributes {dimension_semantics = [#tpu.dimension_semantics<parallel>], iteration_bounds = array<i64: 1>, scalar_prefetch = 0 : i64, scratch_operands = 0 : i64, tpu.core_type = #tpu.core_type<tc>, window_params = [{transform_indices = @transform_0, window_bounds = array<i64: 2, 256>}, {pipeline_mode = #tpu.pipeline_mode<synchronous>, transform_indices = @transform_1, window_bounds = array<i64: 256, 10>}, {pipeline_mode = #tpu.pipeline_mode<synchronous>, transform_indices = @transform_2, window_bounds = array<i64: 1, 10>}, {transform_indices = @transform_3, window_bounds = array<i64: 2, 10>}]} {
    %c0 = arith.constant 0 : index
    %c0_0 = arith.constant 0 : index
    %0 = vector.load %arg1[%c0, %c0_0] : memref<2x256xf32, #tpu.memory_space<vmem>>, vector<2x256xf32>
    %c0_1 = arith.constant 0 : index
    %c0_2 = arith.constant 0 : index
    %1 = vector.load %arg2[%c0_1, %c0_2] : memref<256x10xf32, #tpu.memory_space<vmem>>, vector<256x10xf32>
    %cst = arith.constant dense<0.000000e+00> : vector<2x10xf32>
    %2 = tpu.matmul %0, %1, %cst {dimension_numbers = #tpu.dot_dimension_numbers<[1], [0], [0], [1], [0, 0, 1, 1], [], []>} : vector<2x256xf32>, vector<256x10xf32>, vector<2x10xf32> -> vector<2x10xf32>
    %c0_3 = arith.constant 0 : index
    %c0_4 = arith.constant 0 : index
    %3 = vector.load %arg3[%c0_3, %c0_4] : memref<1x10xf32, #tpu.memory_space<vmem>>, vector<1x10xf32>
    %4 = vector.broadcast %3 : vector<1x10xf32> to vector<2x10xf32>
    %5 = arith.addf %2, %4 : vector<2x10xf32>
    %cst_5 = arith.constant dense<0xFF800000> : vector<2xf32>
    %6 = vector.multi_reduction <maximumf>, %5, %cst_5 [1] : vector<2x10xf32> to vector<2xf32>
    %7 = vector.shape_cast %6 : vector<2xf32> to vector<2x1xf32>
    %8 = vector.broadcast %7 : vector<2x1xf32> to vector<2x10xf32>
    %9 = arith.subf %5, %8 : vector<2x10xf32>
    %10 = math.exp %9 : vector<2x10xf32>
    %cst_6 = arith.constant dense<0.000000e+00> : vector<2xf32>
    %11 = vector.multi_reduction <add>, %10, %cst_6 [1] : vector<2x10xf32> to vector<2xf32>
    %12 = vector.shape_cast %11 : vector<2xf32> to vector<2x1xf32>
    %13 = vector.broadcast %12 : vector<2x1xf32> to vector<2x10xf32>
    %14 = arith.divf %10, %13 : vector<2x10xf32>
    %c0_7 = arith.constant 0 : index
    %c0_8 = arith.constant 0 : index
    %15 = vector.load %arg4[%c0_7, %c0_8] : memref<2x10xf32, #tpu.memory_space<vmem>>, vector<2x10xf32>
    tpu.vector_store %arg4[%c0_7, %c0_8], %14 {strides = array<i32>} : memref<2x10xf32, #tpu.memory_space<vmem>>, vector<2x10xf32>,
    return
  }
  func.func @transform_0(%arg0: i32) -> (i32, i32) {
    %c0_i32 = arith.constant 0 : i32
    %c0_i32_0 = arith.constant 0 : i32
    return %arg0, %c0_i32 : i32, i32
  }
  func.func @transform_1(%arg0: i32) -> (i32, i32) {
    %c0_i32 = arith.constant 0 : i32
    %c0_i32_0 = arith.constant 0 : i32
    %c0_i32_1 = arith.constant 0 : i32
    return %c0_i32, %c0_i32_0 : i32, i32
  }
  func.func @transform_2(%arg0: i32) -> (i32, i32) {
    %c0_i32 = arith.constant 0 : i32
    %c0_i32_0 = arith.constant 0 : i32
    %c0_i32_1 = arith.constant 0 : i32
    return %c0_i32, %c0_i32_0 : i32, i32
  }
  func.func @transform_3(%arg0: i32) -> (i32, i32) {
    %c0_i32 = arith.constant 0 : i32
    %c0_i32_0 = arith.constant 0 : i32
    return %arg0, %c0_i32 : i32, i32
  }
}

</mosaic_0001>

<llo_original>
// kernel: netc_forward.1
$region0: #{netc_forward.1}
  #allocation0 [shape = 'u32[]', space=smem, size = 0x4, offset = 0x4, fixed_abs, tag = 'smem constant byte address 0x4 - core index']
  #allocation1 [shape = 'u32[72,128]{1,0:T(1,128)}', space=vmem, size = 0x9000, scoped, tag = 'internal scratch']
  %s0 = inlined_call_operand.vmem [shape: f32[2,256], index: 0, kind: input, shape index: {}]
  %s1 = inlined_call_operand.vmem [shape: f32[256,10], index: 1, kind: input, shape index: {}]
  %s2 = inlined_call_operand.vmem [shape: f32[1,10], index: 2, kind: input, shape index: {}]
  %s3 = inlined_call_operand.hbm [shape: f32[2,10], index: 3, kind: output, shape index: {}]
  %s4 = sld [smem:[#allocation0]]
  $region22: #{netc_forward.1} parent=0
    _
  %s6 = ssub.s32 1, %s4
  %s7 = scalar_select 0, %s6, %s4
  $region1: #{netc_forward.1} parent=0
    #allocation2 [shape = 'u8[1024]{0}', space=vmem, size = 0x400, scoped, tag = 'output window, operand 0, single buffered']
    #allocation3 [shape = 's32[1]{0}', space=sflag, size = 0x4, scoped, tag = 'scoped memory for netc_forward.1']
    %8 = vsyncpa [#allocation3], 0
    // Predicated region
    $region2: #{netc_forward.1} parent=1 // pred_check
      _
    $region3: #{netc_forward.1} parent=1 // pred_check_branch
      %10 = sbr.rel (0) target = $region5
    $region4: #{netc_forward.1} parent=1 // pred_region
      _
    $region5: #{netc_forward.1} parent=1 // pred_fallthru
      _
    // Predicated region
    $region6: #{netc_forward.1} parent=1 // pred_check
      _
    $region7: #{netc_forward.1} parent=1 // pred_check_branch
      %12 = sbr.rel (0) target = $region9
    $region8: #{netc_forward.1} parent=1 // pred_region
      _
    $region9: #{netc_forward.1} parent=1 // pred_fallthru
      _
    // Predicated region
    $region10: #{netc_forward.1} parent=1 // pred_check
      _
    $region11: #{netc_forward.1} parent=1 // pred_check_branch
      %14 = sbr.rel (0) target = $region13
    $region12: #{netc_forward.1} parent=1 // pred_region
      _
    $region13: #{netc_forward.1} parent=1 // pred_fallthru
      _
    %v15 = vld [vmem:[%s0] sm:$0xf]
    %v16 = vld [vmem:[%s1] sm:$0xff]
    %v17 = vld [vmem:[%s1 + $0x8] sm:$0xff]
    %v18 = vld [vmem:[%s1 + $0x10] sm:$0xff]
    %v19 = vld [vmem:[%s1 + $0x18] sm:$0xff]
    %v20 = vld [vmem:[%s1 + $0x20] sm:$0xff]
    %v21 = vld [vmem:[%s1 + $0x28] sm:$0xff]
    %v22 = vld [vmem:[%s1 + $0x30] sm:$0xff]
    %v23 = vld [vmem:[%s1 + $0x38] sm:$0xff]
    %v24 = vld [vmem:[%s1 + $0x40] sm:$0xff]
    %v25 = vld [vmem:[%s1 + $0x48] sm:$0xff]
    %v26 = vld [vmem:[%s1 + $0x50] sm:$0xff]
    %v27 = vld [vmem:[%s1 + $0x58] sm:$0xff]
    %v28 = vld [vmem:[%s1 + $0x60] sm:$0xff]
    %v29 = vld [vmem:[%s1 + $0x68] sm:$0xff]
    %v30 = vld [vmem:[%s1 + $0x70] sm:$0xff]
    %v31 = vld [vmem:[%s1 + $0x78] sm:$0xff]
    %v32 = vld [vmem:[%s1 + $0x80] sm:$0xff]
    %v33 = vld [vmem:[%s1 + $0x88] sm:$0xff]
    %v34 = vld [vmem:[%s1 + $0x90] sm:$0xff]
    %v35 = vld [vmem:[%s1 + $0x98] sm:$0xff]
    %v36 = vld [vmem:[%s1 + $0xa0] sm:$0xff]
    %v37 = vld [vmem:[%s1 + $0xa8] sm:$0xff]
    %v38 = vld [vmem:[%s1 + $0xb0] sm:$0xff]
    %v39 = vld [vmem:[%s1 + $0xb8] sm:$0xff]
    %v40 = vld [vmem:[%s1 + $0xc0] sm:$0xff]
    %v41 = vld [vmem:[%s1 + $0xc8] sm:$0xff]
    %v42 = vld [vmem:[%s1 + $0xd0] sm:$0xff]
    %v43 = vld [vmem:[%s1 + $0xd8] sm:$0xff]
    %v44 = vld [vmem:[%s1 + $0xe0] sm:$0xff]
    %v45 = vld [vmem:[%s1 + $0xe8] sm:$0xff]
    %v46 = vld [vmem:[%s1 + $0xf0] sm:$0xff]
    %v47 = vld [vmem:[%s1 + $0xf8] sm:$0xff]
    %v48 = vld [vmem:[%s2] sm:$0x1]
    %v50 = vperm.slane %v48, 0
    %53 = vst [vmem:[#allocation1] ss:$4 sm:$0xff] %v15
    %v54 = vld.sshfl [vmem:[#allocation1] sm:$0xff pattern:$0x73625140]
    %v55 = vld.sshfl [vmem:[#allocation1 + $0x8] sm:$0xff pattern:$0x73625140]
    %58 = vmatpush.msra.mxu0 %v31
    %59 = vmatpush.msra.mxu0 %v30
    %60 = vmatpush.msra.mxu0 %v29
    %61 = vmatpush.msra.mxu0 %v28
    %62 = vmatpush.msra.mxu0 %v27
    %63 = vmatpush.msra.mxu0 %v26
    %64 = vmatpush.msra.mxu0 %v25
    %65 = vmatpush.msra.mxu0 %v24
    %66 = vmatpush.msra.mxu0 %v23
    %67 = vmatpush.msra.mxu0 %v22
    %68 = vmatpush.msra.mxu0 %v21
    %69 = vmatpush.msra.mxu0 %v20
    %70 = vmatpush.msra.mxu0 %v19
    %71 = vmatpush.msra.mxu0 %v18
    %72 = vmatpush.msra.mxu0 %v17
    %73 = vmatpush.msra.mxu0 %v16
    %74 = vmatmul.f32.gmra.mxu0 %v54
    %v75 = vpop.f32.mrf.mxu0
    %v76 = vadd.f32 %v50, %v75
    %77 = vdwg.mxu0
    %78 = vmatpush.msra.mxu0 %v47
    %79 = vmatpush.msra.mxu0 %v46
    %80 = vmatpush.msra.mxu0 %v45
    %81 = vmatpush.msra.mxu0 %v44
    %82 = vmatpush.msra.mxu0 %v43
    %83 = vmatpush.msra.mxu0 %v42
    %84 = vmatpush.msra.mxu0 %v41
    %85 = vmatpush.msra.mxu0 %v40
    %86 = vmatpush.msra.mxu0 %v39
    %87 = vmatpush.msra.mxu0 %v38
    %88 = vmatpush.msra.mxu0 %v37
    %89 = vmatpush.msra.mxu0 %v36
    %90 = vmatpush.msra.mxu0 %v35
    %91 = vmatpush.msra.mxu0 %v34
    %92 = vmatpush.msra.mxu0 %v33
    %93 = vmatpush.msra.mxu0 %v32
    %94 = vmatmul.f32.gmra.mxu0 %v55
    %v95 = vpop.f32.mrf.mxu0
    %v96 = vadd.f32 %v76, %v95
    %97 = vdwg.mxu0
    %vm98 = vcmask 74752
    %v99 = vsel %vm98, %v96, -inf
    %100 = vmax.xlane.f32.xlu0 %v99
    %v101 = vpop.xlane.xlu0 %100
    %v102 = vsub.f32 %v96, %v101
    %v103 = vmul.f32 %v102, 1.442695
    %v104 = vpow.pop %v103
    %v105 = vsel %vm98, %v104, 0.0
    %106 = vadd.xlane.f32.xlu0 %v105
    %v107 = vpop.xlane.xlu0 %106
    %v108 = vrcp.pop %v107
    %v109 = vmul.f32 %v107, %v108
    %v110 = vsub.f32 1.0, %v109
    %v111 = vmul.f32 %v108, %v110
    %v112 = vadd.f32 %v108, %v111
    %vm113 = vweird.f32 %v107
    %vm114 = vweird.f32 %v108
    %vm115 = vmor %vm113, %vm114
    %v116 = vsel %vm115, %v108, %v112
    %v117 = vand.u32 2147483647, %v107
    %vm118 = vcmp.eq.f32.partialorder %v117, 8.507059e+37
    %v119 = vand.u32 %v107, 2147483648
    %v120 = vor.u32 1.1754944e-38, %v119
    %v121 = vsel %vm118, %v120, %v116
    %v122 = vmul.f32 %v104, %v121
    %123 = vst.msk [vmem:[#allocation2] sm:$0x3] %vm98, %v122
    // Predicated region
    $region14: #{netc_forward.1} parent=1 // pred_check
      _
    $region15: #{netc_forward.1} parent=1 // pred_check_branch
      %125 = sbr.rel (0) target = $region17
    $region16: #{netc_forward.1} parent=1 // pred_region
      %127 = vsyncadd [#allocation3], 0
      %s129 = sshll.u32 [#allocation2], 4
      %s130 = int_to_ptr.vmem [resolvable:$true] %s129
      %s131 = sshll.u32 %s3, 4
      %s132 = int_to_ptr.hbm [resolvable:$true] %s131
      %134 = dma.vmem_to_hbm [thread:$0]  %s130, 32, %s132, [#allocation3]
    $region17: #{netc_forward.1} parent=1 // pred_fallthru
      _
    // Predicated region
    $region18: #{netc_forward.1} parent=1 // pred_check
      _
    $region19: #{netc_forward.1} parent=1 // pred_check_branch
      %136 = sbr.rel (0) target = $region21
    $region20: #{netc_forward.1} parent=1 // pred_region
      %138 = dma.done [#allocation3], 32
    $region21: #{netc_forward.1} parent=1 // pred_fallthru
      _
    %139 = vsyncpa [#allocation3], 1

</llo_original>
